<compile_context>
chip_gen: v6e
topology: v6e:2x2x1
jax: 0.10.0
libtpu: 0.0.40
codegen_flags: <defaults>
</compile_context>

<pallas_src>
import jax
import jax.numpy as jnp
from jax.experimental import pallas as pl
from jax.experimental.pallas import tpu as pltpu

# Synthetic environment dims (CartPole-like): obs dim 4, 2 actions.
N_STATES = 4
N_ACTIONS = 2
HIDDEN = 50

LANE = 128
SUBLANE = 8
HIDDEN_PAD = LANE            # fc1 width padded 50 -> 128 (zeros)
N_OUT_PAD = LANE             # lane-dense padded output width
MAX_BATCH_TILE = 2048        # batch rows per grid step (multiple of 8)


def _round_up(n, m):
    return ((n + m - 1) // m) * m


def _batch_tile(B):
    """Batch rows per grid step.

    Targets >=2 grid steps whenever B > SUBLANE (so both v7x TensorCores get
    work under dimension_semantics=("parallel",)), capped at MAX_BATCH_TILE to
    amortize the fixed per-grid-step cost for large replay batches.
    """
    half = _round_up(-(-B // 2), SUBLANE)
    return max(SUBLANE, min(MAX_BATCH_TILE, half))


def _net_kernel(x_ref, w1_ref, b1_ref, w2_ref, b2_ref, o_ref):
    # fc1: x @ W1 on the MXU with f32 accumulation; bias + ReLU in f32 (VPU).
    h = jnp.dot(x_ref[...], w1_ref[...], preferred_element_type=jnp.float32)
    h = jnp.maximum(h + b1_ref[...], 0.0)
    # out: h @ W2 + b2.  The cast is a no-op in the default f32 path and
    # selects the bf16 MXU path when bf16 weights were prepared.
    y = jnp.dot(h.astype(w2_ref.dtype), w2_ref[...],
                preferred_element_type=jnp.float32)
    o_ref[...] = (y + b2_ref[...]).astype(o_ref.dtype)


def net_forward(x, w1_p, b1_p, w2_p, b2_p):
    """Forward pass.

    x:    (B, N_STATES) float32.
    w1_p: (N_STATES, HIDDEN_PAD)   pre-transposed/padded/cast (prepare_params)
    b1_p: (1, HIDDEN_PAD) f32
    w2_p: (HIDDEN_PAD, N_OUT_PAD)  pre-transposed/padded/cast
    b2_p: (1, N_OUT_PAD) f32
    Returns Q-values (B, N_ACTIONS) float32.
    """
    B = x.shape[0]
    if x.dtype != w1_p.dtype:          # only a real op in the bf16 path
        x = x.astype(w1_p.dtype)

    tb = _batch_tile(B)
    grid = (pl.cdiv(B, tb),)           # tail block overhangs; no x padding

    out_padded = pl.pallas_call(
        _net_kernel,
        out_shape=jax.ShapeDtypeStruct((B, N_OUT_PAD), jnp.float32),
        grid=grid,
        in_specs=[
            pl.BlockSpec((tb, N_STATES), lambda i: (i, 0)),          # batch tile
            pl.BlockSpec((N_STATES, HIDDEN_PAD), lambda i: (0, 0)),  # resident
            pl.BlockSpec((1, HIDDEN_PAD), lambda i: (0, 0)),         # resident
            pl.BlockSpec((HIDDEN_PAD, N_OUT_PAD), lambda i: (0, 0)), # resident
            pl.BlockSpec((1, N_OUT_PAD), lambda i: (0, 0)),          # resident
        ],
        out_specs=pl.BlockSpec((tb, N_OUT_PAD), lambda i: (i, 0)),
        compiler_params=pltpu.CompilerParams(
            dimension_semantics=("parallel",),       # megacore on v7x
            vmem_limit_bytes=32 * 1024 * 1024,       # safe headroom on v5e
        ),
    )(x, w1_p, b1_p, w2_p, b2_p)

    # TODO(synk): for very large B (>~100K) fuse the consumer (argmax / TD
    # gather) into the kernel to avoid the 64x output write amplification.
    return out_padded[:, :N_ACTIONS]


def init_params(key):
    """PyTorch-layout parameters, matching the module's init.

    fc1.weight (50, N_STATES) ~ N(0, 0.1); out.weight (N_ACTIONS, 50) ~ N(0, 0.1).
    Biases use PyTorch's default Linear init U(-1/sqrt(fan_in), 1/sqrt(fan_in)).
    """
    k1, k2, k3, k4 = jax.random.split(key, 4)
    w1 = 0.1 * jax.random.normal(k1, (HIDDEN, N_STATES), dtype=jnp.float32)
    w2 = 0.1 * jax.random.normal(k2, (N_ACTIONS, HIDDEN), dtype=jnp.float32)
    bound1 = 1.0 / jnp.sqrt(jnp.float32(N_STATES))
    bound2 = 1.0 / jnp.sqrt(jnp.float32(HIDDEN))
    b1 = jax.random.uniform(k3, (HIDDEN,), jnp.float32, -bound1, bound1)
    b2 = jax.random.uniform(k4, (N_ACTIONS,), jnp.float32, -bound2, bound2)
    return w1, b1, w2, b2


def prepare_params(w1, b1, w2, b2, *, compute_dtype=jnp.float32):
    """One-time preprocessing: transpose to (in, out), zero-pad HIDDEN->128 and
    out-cols->128, cast weights to compute_dtype.  Biases stay f32."""
    w1_p = jnp.pad(w1.T, ((0, 0), (0, HIDDEN_PAD - HIDDEN))).astype(compute_dtype)
    b1_p = jnp.pad(b1.reshape(1, -1),
                   ((0, 0), (0, HIDDEN_PAD - HIDDEN))).astype(jnp.float32)
    w2_p = jnp.pad(w2.T, ((0, HIDDEN_PAD - HIDDEN),
                          (0, N_OUT_PAD - N_ACTIONS))).astype(compute_dtype)
    b2_p = jnp.pad(b2.reshape(1, -1),
                   ((0, 0), (0, N_OUT_PAD - N_ACTIONS))).astype(jnp.float32)
    return w1_p, b1_p, w2_p, b2_p


def reference_forward(x, w1, b1, w2, b2):
    h = jnp.maximum(x @ w1.T + b1, 0.0)
    return h @ w2.T + b2


if __name__ == "__main__":
    key = jax.random.PRNGKey(0)
    kx, kp = jax.random.split(key)
    w1, b1, w2, b2 = init_params(kp)

    # One-time parameter preprocessing (hoisted out of the per-call graph).
    params_f32 = prepare_params(w1, b1, w2, b2)

    # 1) Small-shape check (B=2, f32) — single overhanging grid step.
    x_small = jax.random.normal(kx, (2, N_STATES), dtype=jnp.float32)
    out_small = jax.block_until_ready(net_forward(x_small, *params_f32))
    ref_small = reference_forward(x_small, w1, b1, w2, b2)
    assert out_small.shape == (2, N_ACTIONS)
    assert jnp.allclose(out_small, ref_small, atol=1e-5, rtol=1e-5)

    # 2) Batched check (B=512, f32) — 2 parallel grid steps (both v7x TCs busy).
    x_big = jax.random.normal(kx, (512, N_STATES), dtype=jnp.float32)
    out_big = jax.block_until_ready(net_forward(x_big, *params_f32))
    ref_big = reference_forward(x_big, w1, b1, w2, b2)
    assert out_big.shape == (512, N_ACTIONS)
    assert jnp.allclose(out_big, ref_big, atol=1e-5, rtol=1e-5)

    # 3) Ragged batch (B=300, not a multiple of the tile) — exercises the
    #    overhanging tail block with masked output writeback (no x padding op).
    x_odd = jax.random.normal(kx, (300, N_STATES), dtype=jnp.float32)
    out_odd = jax.block_until_ready(net_forward(x_odd, *params_f32))
    ref_odd = reference_forward(x_odd, w1, b1, w2, b2)
    assert out_odd.shape == (300, N_ACTIONS)
    assert jnp.allclose(out_odd, ref_odd, atol=1e-5, rtol=1e-5)

    # 4) Opt-in bf16 MXU-input variant (pre-cast at prepare time), f32 accum.
    params_bf16 = prepare_params(w1, b1, w2, b2, compute_dtype=jnp.bfloat16)
    out_bf16 = jax.block_until_ready(net_forward(x_big, *params_bf16))
    assert jnp.allclose(out_bf16, ref_big, atol=2e-2, rtol=2e-2)

    print("KERNEL_OK")
</pallas_src>

<mosaic_0001>
module attributes {stable_mosaic.version = 11 : i64} {
  func.func @_net_kernel(%arg0: i32, %arg1: memref<8x4xf32, #tpu.memory_space<vmem>>, %arg2: memref<4x128xf32, #tpu.memory_space<vmem>>, %arg3: memref<1x128xf32, #tpu.memory_space<vmem>>, %arg4: memref<128x128xf32, #tpu.memory_space<vmem>>, %arg5: memref<1x128xf32, #tpu.memory_space<vmem>>, %arg6: memref<8x128xf32, #tpu.memory_space<vmem>>) attributes {dimension_semantics = [#tpu.dimension_semantics<parallel>], iteration_bounds = array<i64: 1>, scalar_prefetch = 0 : i64, scratch_operands = 0 : i64, tpu.core_type = #tpu.core_type<tc>, window_params = [{transform_indices = @transform_0, window_bounds = array<i64: 8, 4>}, {pipeline_mode = #tpu.pipeline_mode<synchronous>, transform_indices = @transform_1, window_bounds = array<i64: 4, 128>}, {pipeline_mode = #tpu.pipeline_mode<synchronous>, transform_indices = @transform_2, window_bounds = array<i64: 1, 128>}, {pipeline_mode = #tpu.pipeline_mode<synchronous>, transform_indices = @transform_3, window_bounds = array<i64: 128, 128>}, {pipeline_mode = #tpu.pipeline_mode<synchronous>, transform_indices = @transform_4, window_bounds = array<i64: 1, 128>}, {transform_indices = @transform_5, window_bounds = array<i64: 8, 128>}]} {
    %c0 = arith.constant 0 : index
    %c0_0 = arith.constant 0 : index
    %0 = vector.load %arg1[%c0, %c0_0] : memref<8x4xf32, #tpu.memory_space<vmem>>, vector<8x4xf32>
    %c0_1 = arith.constant 0 : index
    %c0_2 = arith.constant 0 : index
    %1 = vector.load %arg2[%c0_1, %c0_2] : memref<4x128xf32, #tpu.memory_space<vmem>>, vector<4x128xf32>
    %cst = arith.constant dense<0.000000e+00> : vector<8x128xf32>
    %2 = tpu.matmul %0, %1, %cst {dimension_numbers = #tpu.dot_dimension_numbers<[1], [0], [0], [1], [0, 0, 1, 1], [], []>} : vector<8x4xf32>, vector<4x128xf32>, vector<8x128xf32> -> vector<8x128xf32>
    %c0_3 = arith.constant 0 : index
    %c0_4 = arith.constant 0 : index
    %3 = vector.load %arg3[%c0_3, %c0_4] : memref<1x128xf32, #tpu.memory_space<vmem>>, vector<1x128xf32>
    %4 = vector.broadcast %3 : vector<1x128xf32> to vector<8x128xf32>
    %5 = arith.addf %2, %4 : vector<8x128xf32>
    %cst_5 = arith.constant 0.000000e+00 : f32
    %6 = vector.broadcast %cst_5 : f32 to vector<8x128xf32>
    %7 = arith.maximumf %5, %6 : vector<8x128xf32>
    %c0_6 = arith.constant 0 : index
    %c0_7 = arith.constant 0 : index
    %8 = vector.load %arg4[%c0_6, %c0_7] : memref<128x128xf32, #tpu.memory_space<vmem>>, vector<128x128xf32>
    %cst_8 = arith.constant dense<0.000000e+00> : vector<8x128xf32>
    %9 = tpu.matmul %7, %8, %cst_8 {dimension_numbers = #tpu.dot_dimension_numbers<[1], [0], [0], [1], [0, 0, 1, 1], [], []>} : vector<8x128xf32>, vector<128x128xf32>, vector<8x128xf32> -> vector<8x128xf32>
    %c0_9 = arith.constant 0 : index
    %c0_10 = arith.constant 0 : index
    %10 = vector.load %arg5[%c0_9, %c0_10] : memref<1x128xf32, #tpu.memory_space<vmem>>, vector<1x128xf32>
    %11 = vector.broadcast %10 : vector<1x128xf32> to vector<8x128xf32>
    %12 = arith.addf %9, %11 : vector<8x128xf32>
    %c0_11 = arith.constant 0 : index
    %c0_12 = arith.constant 0 : index
    %13 = vector.load %arg6[%c0_11, %c0_12] : memref<8x128xf32, #tpu.memory_space<vmem>>, vector<8x128xf32>
    tpu.vector_store %arg6[%c0_11, %c0_12], %12 {strides = array<i32>} : memref<8x128xf32, #tpu.memory_space<vmem>>, vector<8x128xf32>,
    return
  }
  func.func @transform_0(%arg0: i32) -> (i32, i32) {
    %c0_i32 = arith.constant 0 : i32
    %c0_i32_0 = arith.constant 0 : i32
    return %arg0, %c0_i32 : i32, i32
  }
  func.func @transform_1(%arg0: i32) -> (i32, i32) {
    %c0_i32 = arith.constant 0 : i32
    %c0_i32_0 = arith.constant 0 : i32
    %c0_i32_1 = arith.constant 0 : i32
    return %c0_i32, %c0_i32_0 : i32, i32
  }
  func.func @transform_2(%arg0: i32) -> (i32, i32) {
    %c0_i32 = arith.constant 0 : i32
    %c0_i32_0 = arith.constant 0 : i32
    %c0_i32_1 = arith.constant 0 : i32
    return %c0_i32, %c0_i32_0 : i32, i32
  }
  func.func @transform_3(%arg0: i32) -> (i32, i32) {
    %c0_i32 = arith.constant 0 : i32
    %c0_i32_0 = arith.constant 0 : i32
    %c0_i32_1 = arith.constant 0 : i32
    return %c0_i32, %c0_i32_0 : i32, i32
  }
  func.func @transform_4(%arg0: i32) -> (i32, i32) {
    %c0_i32 = arith.constant 0 : i32
    %c0_i32_0 = arith.constant 0 : i32
    %c0_i32_1 = arith.constant 0 : i32
    return %c0_i32, %c0_i32_0 : i32, i32
  }
  func.func @transform_5(%arg0: i32) -> (i32, i32) {
    %c0_i32 = arith.constant 0 : i32
    %c0_i32_0 = arith.constant 0 : i32
    return %arg0, %c0_i32 : i32, i32
  }
}

</mosaic_0001>

<llo_original>
// kernel: tpu_custom_call.1
$region0: #{tpu_custom_call.1}
  #allocation0 [shape = 'u32[]', space=smem, size = 0x4, offset = 0x4, fixed_abs, tag = 'smem constant byte address 0x4 - core index']
  #allocation1 [shape = 'u32[144,128]{1,0:T(1,128)}', space=vmem, size = 0x12000, scoped, tag = 'internal scratch']
  %s0 = inlined_call_operand.hbm [shape: f32[2,4], index: 0, kind: input, shape index: {}]
  %s1 = inlined_call_operand.hbm [shape: f32[4,128], index: 1, kind: input, shape index: {}]
  %s2 = inlined_call_operand.vmem [shape: f32[1,128], index: 2, kind: input, shape index: {}]
  %s3 = inlined_call_operand.hbm [shape: f32[128,128], index: 3, kind: input, shape index: {}]
  %s4 = inlined_call_operand.vmem [shape: f32[1,128], index: 4, kind: input, shape index: {}]
  %s5 = inlined_call_operand.hbm [shape: f32[2,128], index: 5, kind: output, shape index: {}]
  %s6 = sld [smem:[#allocation0]]
  $region42: #{tpu_custom_call.1} parent=0
    _
  %s8 = ssub.s32 1, %s6
  %s9 = scalar_select 0, %s8, %s6
  $region1: #{tpu_custom_call.1} parent=0
    #allocation2 [shape = 'u8[4096]{0}', space=vmem, size = 0x1000, scoped, tag = 'input window, operand 0, single buffered']
    #allocation3 [shape = 's32[1]{0}', space=sflag, size = 0x4, scoped, tag = 'scoped memory for tpu_custom_call.1']
    #allocation4 [shape = 's32[1]{0}', space=sflag, size = 0x4, scoped, tag = 'scoped memory for tpu_custom_call.1']
    #allocation5 [shape = 'u8[2048]{0}', space=vmem, size = 0x800, scoped, tag = 'input window, operand 1, single buffered']
    #allocation6 [shape = 's32[1]{0}', space=sflag, size = 0x4, scoped, tag = 'scoped memory for tpu_custom_call.1']
    #allocation7 [shape = 'u8[65536]{0}', space=vmem, size = 0x10000, scoped, tag = 'input window, operand 3, single buffered']
    #allocation8 [shape = 'u8[4096]{0}', space=vmem, size = 0x1000, scoped, tag = 'output window, operand 0, single buffered']
    %10 = vsyncpa [#allocation3], 0
    %11 = vsyncpa [#allocation6], 0
    %12 = vsyncpa [#allocation4], 0
    // Predicated region
    $region2: #{tpu_custom_call.1} parent=1 // pred_check
      _
    $region3: #{tpu_custom_call.1} parent=1 // pred_check_branch
      %14 = sbr.rel (0) target = $region5
    $region4: #{tpu_custom_call.1} parent=1 // pred_region
      %s16 = ssub.s32 128, 32
      %17 = vsyncadd [#allocation3], %s16
      %s18 = sshll.u32 [#allocation2], 4
      %s19 = int_to_ptr.vmem [resolvable:$true] %s18
      %24 = dma.hbm_to_vmem [thread:$0]  %s0, 32, %s19, [#allocation3], 32, 32, 2
    $region5: #{tpu_custom_call.1} parent=1 // pred_fallthru
      _
    // Predicated region
    $region6: #{tpu_custom_call.1} parent=1 // pred_check
      _
    $region7: #{tpu_custom_call.1} parent=1 // pred_check_branch
      %26 = sbr.rel (0) target = $region9
    $region8: #{tpu_custom_call.1} parent=1 // pred_region
      %s28 = ssub.s32 64, 64
      %29 = vsyncadd [#allocation6], %s28
      %s31 = sshll.u32 [#allocation5], 4
      %s32 = int_to_ptr.vmem [resolvable:$true] %s31
      %34 = dma.hbm_to_vmem [thread:$0]  %s1, 64, %s32, [#allocation6]
    $region9: #{tpu_custom_call.1} parent=1 // pred_fallthru
      _
    // Predicated region
    $region10: #{tpu_custom_call.1} parent=1 // pred_check
      _
    $region11: #{tpu_custom_call.1} parent=1 // pred_check_branch
      %36 = sbr.rel (0) target = $region13
    $region12: #{tpu_custom_call.1} parent=1 // pred_region
      _
    $region13: #{tpu_custom_call.1} parent=1 // pred_fallthru
      _
    // Predicated region
    $region14: #{tpu_custom_call.1} parent=1 // pred_check
      _
    $region15: #{tpu_custom_call.1} parent=1 // pred_check_branch
      %38 = sbr.rel (0) target = $region17
    $region16: #{tpu_custom_call.1} parent=1 // pred_region
      %s40 = ssub.s32 2048, 2048
      %41 = vsyncadd [#allocation6], %s40
      %s42 = sshll.u32 [#allocation7], 4
      %s43 = int_to_ptr.vmem [resolvable:$true] %s42
      %48 = dma.hbm_to_vmem [thread:$0]  %s3, 2048, %s43, [#allocation6], 128, 128, 8
    $region17: #{tpu_custom_call.1} parent=1 // pred_fallthru
      _
    // Predicated region
    $region18: #{tpu_custom_call.1} parent=1 // pred_check
      _
    $region19: #{tpu_custom_call.1} parent=1 // pred_check_branch
      %50 = sbr.rel (0) target = $region21
    $region20: #{tpu_custom_call.1} parent=1 // pred_region
      _
    $region21: #{tpu_custom_call.1} parent=1 // pred_fallthru
      _
    // Predicated region
    $region22: #{tpu_custom_call.1} parent=1 // pred_check
      _
    $region23: #{tpu_custom_call.1} parent=1 // pred_check_branch
      %52 = sbr.rel (0) target = $region25
    $region24: #{tpu_custom_call.1} parent=1 // pred_region
      %53 = dma.done [#allocation3], 128
    $region25: #{tpu_custom_call.1} parent=1 // pred_fallthru
      _
    // Predicated region
    $region26: #{tpu_custom_call.1} parent=1 // pred_check
      _
    $region27: #{tpu_custom_call.1} parent=1 // pred_check_branch
      %55 = sbr.rel (0) target = $region29
    $region28: #{tpu_custom_call.1} parent=1 // pred_region
      %56 = dma.done [#allocation6], 64
    $region29: #{tpu_custom_call.1} parent=1 // pred_fallthru
      _
    // Predicated region
    $region30: #{tpu_custom_call.1} parent=1 // pred_check
      _
    $region31: #{tpu_custom_call.1} parent=1 // pred_check_branch
      %58 = sbr.rel (0) target = $region33
    $region32: #{tpu_custom_call.1} parent=1 // pred_region
      %59 = dma.done [#allocation6], 2048
    $region33: #{tpu_custom_call.1} parent=1 // pred_fallthru
      _
    %v60 = vld [vmem:[#allocation2] sm:$0xff]
    %v61 = vld [vmem:[#allocation5] sm:$0xf]
    %v62 = vld [vmem:[%s2] sm:$0x1]
    %v64 = vlaneseq
    %v65 = vshrl.u32 %v64, 7
    %v66 = vsub.s32 0, %v65
    %v67 = vrot.slane %v62, %v66
    %vm69 = vcmask 31744
    %v71 = vsel %vm69, %v60, 0
    %vm73 = vcmask 1043456
    %v75 = vsel %vm73, %v61, 0
    %77 = vmatprep.subr.mxu0 0.0
    %78 = vmatpush1.msra.mxu0 0.0
    %79 = vmatprep.subr.mxu0 0.0
    %80 = vmatpush1.msra.mxu0 0.0
    %81 = vmatprep.subr.mxu0 0.0
    %82 = vmatpush1.msra.mxu0 0.0
    %83 = vmatprep.subr.mxu0 0.0
    %84 = vmatpush1.msra.mxu0 0.0
    %85 = vmatprep.subr.mxu0 0.0
    %86 = vmatpush1.msra.mxu0 0.0
    %87 = vmatprep.subr.mxu0 0.0
    %88 = vmatpush1.msra.mxu0 0.0
    %89 = vmatprep.subr.mxu0 0.0
    %90 = vmatpush1.msra.mxu0 0.0
    %91 = vmatprep.subr.mxu0 0.0
    %92 = vmatpush1.msra.mxu0 0.0
    %93 = vmatprep.subr.mxu0 0.0
    %94 = vmatpush1.msra.mxu0 0.0
    %95 = vmatprep.subr.mxu0 0.0
    %96 = vmatpush1.msra.mxu0 0.0
    %97 = vmatprep.subr.mxu0 0.0
    %98 = vmatpush1.msra.mxu0 0.0
    %99 = vmatprep.subr.mxu0 0.0
    %100 = vmatpush1.msra.mxu0 0.0
    %101 = vmatprep.subr.mxu0 0.0
    %102 = vmatpush1.msra.mxu0 0.0
    %103 = vmatprep.subr.mxu0 0.0
    %104 = vmatpush1.msra.mxu0 0.0
    %105 = vmatprep.subr.mxu0 0.0
    %106 = vmatpush1.msra.mxu0 0.0
    %107 = vmatprep.subr.mxu0 0.0
    %108 = vmatpush1.msra.mxu0 %v75
    %109 = vmatprep.subr.mxu0 0.0
    %110 = vmatpush2.msra.mxu0 0.0
    %111 = vmatprep.subr.mxu0 0.0
    %112 = vmatpush2.msra.mxu0 0.0
    %113 = vmatprep.subr.mxu0 0.0
    %114 = vmatpush2.msra.mxu0 0.0
    %115 = vmatprep.subr.mxu0 0.0
    %116 = vmatpush2.msra.mxu0 0.0
    %117 = vmatprep.subr.mxu0 0.0
    %118 = vmatpush2.msra.mxu0 0.0
    %119 = vmatprep.subr.mxu0 0.0
    %120 = vmatpush2.msra.mxu0 0.0
    %121 = vmatprep.subr.mxu0 0.0
    %122 = vmatpush2.msra.mxu0 0.0
    %123 = vmatprep.subr.mxu0 0.0
    %124 = vmatpush2.msra.mxu0 0.0
    %125 = vmatprep.subr.mxu0 0.0
    %126 = vmatpush2.msra.mxu0 0.0
    %127 = vmatprep.subr.mxu0 0.0
    %128 = vmatpush2.msra.mxu0 0.0
    %129 = vmatprep.subr.mxu0 0.0
    %130 = vmatpush2.msra.mxu0 0.0
    %131 = vmatprep.subr.mxu0 0.0
    %132 = vmatpush2.msra.mxu0 0.0
    %133 = vmatprep.subr.mxu0 0.0
    %134 = vmatpush2.msra.mxu0 0.0
    %135 = vmatprep.subr.mxu0 0.0
    %136 = vmatpush2.msra.mxu0 0.0
    %137 = vmatprep.subr.mxu0 0.0
    %138 = vmatpush2.msra.mxu0 0.0
    %139 = vmatprep.subr.mxu0 0.0
    %140 = vmatpush2.msra.mxu0 0.0
    %141 = vmatprep.mubr.f32.mxu0 0.0
    %142 = vmatmul.mubr.f32.gmra.mxu0 %v71
    %v143 = vpop.f32.mrf.mxu0
    %v144 = vadd.f32 %v67, %v143
    %v145 = vpop.f32.mrf.mxu0
    %146 = vdwg.mxu0
    %v147 = vmax.f32 %v144, 0.0
    %v148 = vld [vmem:[#allocation7] sm:$0xff]
    %v149 = vld [vmem:[#allocation7 + $0x8] sm:$0xff]
    %v150 = vld [vmem:[#allocation7 + $0x10] sm:$0xff]
    %v151 = vld [vmem:[#allocation7 + $0x18] sm:$0xff]
    %v152 = vld [vmem:[#allocation7 + $0x20] sm:$0xff]
    %v153 = vld [vmem:[#allocation7 + $0x28] sm:$0xff]
    %v154 = vld [vmem:[#allocation7 + $0x30] sm:$0xff]
    %v155 = vld [vmem:[#allocation7 + $0x38] sm:$0xff]
    %v156 = vld [vmem:[#allocation7 + $0x40] sm:$0xff]
    %v157 = vld [vmem:[#allocation7 + $0x48] sm:$0xff]
    %v158 = vld [vmem:[#allocation7 + $0x50] sm:$0xff]
    %v159 = vld [vmem:[#allocation7 + $0x58] sm:$0xff]
    %v160 = vld [vmem:[#allocation7 + $0x60] sm:$0xff]
    %v161 = vld [vmem:[#allocation7 + $0x68] sm:$0xff]
    %v162 = vld [vmem:[#allocation7 + $0x70] sm:$0xff]
    %v163 = vld [vmem:[#allocation7 + $0x78] sm:$0xff]
    %v164 = vld [vmem:[%s4] sm:$0x1]
    %v166 = vlaneseq
    %v167 = vshrl.u32 %v166, 7
    %v168 = vsub.s32 0, %v167
    %v169 = vrot.slane %v164, %v168
    %171 = vmatprep.subr.mxu0 0.0
    %172 = vmatpush1.msra.mxu0 %v163
    %173 = vmatprep.subr.mxu0 0.0
    %174 = vmatpush1.msra.mxu0 %v162
    %175 = vmatprep.subr.mxu0 0.0
    %176 = vmatpush1.msra.mxu0 %v161
    %177 = vmatprep.subr.mxu0 0.0
    %178 = vmatpush1.msra.mxu0 %v160
    %179 = vmatprep.subr.mxu0 0.0
    %180 = vmatpush1.msra.mxu0 %v159
    %181 = vmatprep.subr.mxu0 0.0
    %182 = vmatpush1.msra.mxu0 %v158
    %183 = vmatprep.subr.mxu0 0.0
    %184 = vmatpush1.msra.mxu0 %v157
    %185 = vmatprep.subr.mxu0 0.0
    %186 = vmatpush1.msra.mxu0 %v156
    %187 = vmatprep.subr.mxu0 0.0
    %188 = vmatpush1.msra.mxu0 %v155
    %189 = vmatprep.subr.mxu0 0.0
    %190 = vmatpush1.msra.mxu0 %v154
    %191 = vmatprep.subr.mxu0 0.0
    %192 = vmatpush1.msra.mxu0 %v153
    %193 = vmatprep.subr.mxu0 0.0
    %194 = vmatpush1.msra.mxu0 %v152
    %195 = vmatprep.subr.mxu0 0.0
    %196 = vmatpush1.msra.mxu0 %v151
    %197 = vmatprep.subr.mxu0 0.0
    %198 = vmatpush1.msra.mxu0 %v150
    %199 = vmatprep.subr.mxu0 0.0
    %200 = vmatpush1.msra.mxu0 %v149
    %201 = vmatprep.subr.mxu0 0.0
    %202 = vmatpush1.msra.mxu0 %v148
    %203 = vmatprep.subr.mxu0 0.0
    %204 = vmatpush2.msra.mxu0 0.0
    %205 = vmatprep.subr.mxu0 0.0
    %206 = vmatpush2.msra.mxu0 0.0
    %207 = vmatprep.subr.mxu0 0.0
    %208 = vmatpush2.msra.mxu0 0.0
    %209 = vmatprep.subr.mxu0 0.0
    %210 = vmatpush2.msra.mxu0 0.0
    %211 = vmatprep.subr.mxu0 0.0
    %212 = vmatpush2.msra.mxu0 0.0
    %213 = vmatprep.subr.mxu0 0.0
    %214 = vmatpush2.msra.mxu0 0.0
    %215 = vmatprep.subr.mxu0 0.0
    %216 = vmatpush2.msra.mxu0 0.0
    %217 = vmatprep.subr.mxu0 0.0
    %218 = vmatpush2.msra.mxu0 0.0
    %219 = vmatprep.subr.mxu0 0.0
    %220 = vmatpush2.msra.mxu0 0.0
    %221 = vmatprep.subr.mxu0 0.0
    %222 = vmatpush2.msra.mxu0 0.0
    %223 = vmatprep.subr.mxu0 0.0
    %224 = vmatpush2.msra.mxu0 0.0
    %225 = vmatprep.subr.mxu0 0.0
    %226 = vmatpush2.msra.mxu0 0.0
    %227 = vmatprep.subr.mxu0 0.0
    %228 = vmatpush2.msra.mxu0 0.0
    %229 = vmatprep.subr.mxu0 0.0
    %230 = vmatpush2.msra.mxu0 0.0
    %231 = vmatprep.subr.mxu0 0.0
    %232 = vmatpush2.msra.mxu0 0.0
    %233 = vmatprep.subr.mxu0 0.0
    %234 = vmatpush2.msra.mxu0 0.0
    %235 = vmatprep.mubr.f32.mxu0 0.0
    %236 = vmatmul.mubr.f32.gmra.mxu0 %v147
    %v237 = vpop.f32.mrf.mxu0
    %v238 = vadd.f32 %v169, %v237
    %v239 = vpop.f32.mrf.mxu0
    %240 = vdwg.mxu0
    %241 = vst [vmem:[#allocation8] sm:$0xff] %v238
    // Predicated region
    $region34: #{tpu_custom_call.1} parent=1 // pred_check
      _
    $region35: #{tpu_custom_call.1} parent=1 // pred_check_branch
      %243 = sbr.rel (0) target = $region37
    $region36: #{tpu_custom_call.1} parent=1 // pred_region
      %s245 = ssub.s32 128, 32
      %246 = vsyncadd [#allocation4], %s245
      %s247 = sshll.u32 [#allocation8], 4
      %s248 = int_to_ptr.vmem [resolvable:$true] %s247
      %253 = dma.vmem_to_hbm [thread:$0]  %s248, 32, %s5, [#allocation4], 32, 32, 2
    $region37: #{tpu_custom_call.1} parent=1 // pred_fallthru
      _
    // Predicated region
    $region38: #{tpu_custom_call.1} parent=1 // pred_check
      _
    $region39: #{tpu_custom_call.1} parent=1 // pred_check_branch
      %255 = sbr.rel (0) target = $region41
    $region40: #{tpu_custom_call.1} parent=1 // pred_region
      %256 = dma.done [#allocation4], 128
    $region41: #{tpu_custom_call.1} parent=1 // pred_fallthru
      _
    %257 = vsyncpa [#allocation3], 1
    %258 = vsyncpa [#allocation6], 1
    %259 = vsyncpa [#allocation4], 1

</llo_original>
